<compile_context>
chip_gen: v6e
topology: v6e:2x2x1
jax: 0.10.0
libtpu: 0.0.40
codegen_flags: <defaults>
</compile_context>

<pallas_src>
import jax
import jax.numpy as jnp
import numpy as np
from jax import lax
from jax.experimental import pallas as pl
from jax.experimental.pallas import tpu as pltpu

CIN, COUT, KH = 3, 16, 3
KTAPS = KH * KH * CIN      # 27 conv taps
KPAD = 32                  # pad contraction dim to a sublane multiple


def _make_fwd_kernel(B, H, W):
    HW = H * W
    L = B * HW

    def shift_left(a, k):
        # a[:, j] -> a[:, (j + k) % L].  Wraparound values only ever land on
        # odd-h / odd-w lanes, which the scattered FC weight zeroes out.
        return jnp.concatenate([a[:, k:], a[:, :k]], axis=1)

    def kernel(cols_ref, wct_ref, bc_ref, wfs_ref, bf_ref, o_ref):
        # ---- conv 3x3 (padding pre-applied in the im2col), transposed MXU ----
        # (COUT, 32) @ (32, B*H*W) -> (COUT, B*H*W): output is lane-dense.
        conv = jnp.dot(wct_ref[...], cols_ref[...],
                       preferred_element_type=jnp.float32)        # f32 accum
        # bias + ReLU in f32 (VPU); bias broadcasts along lanes.
        conv = jnp.maximum(conv + bc_ref[...], 0.0)

        # ---- 2x2 max-pool, stride 2: two lane shifts + two maxes ----
        # lane index = b*H*W + h*W + w; valid results sit at even (h, w).
        m = jnp.maximum(conv, shift_left(conv, 1))   # pair along w
        m = jnp.maximum(m, shift_left(m, W))         # pair along h

        # ---- FC (out_features = 2): broadcast-multiply + reduce, no MXU ----
        # wfs is the torch FC weight scattered onto the un-compacted pooled
        # layout (zeros at odd h/w) and tiled over the B images of the tile.
        rows = []
        for u in range(2):
            prod = m * wfs_ref[u]                                  # (COUT, B*HW) f32
            cs = jnp.sum(prod, axis=0, keepdims=True)              # (1, B*HW)
            rows.append(jnp.concatenate(
                [jnp.sum(cs[:, b * HW:(b + 1) * HW], axis=1, keepdims=True)
                 for b in range(B)], axis=1))                      # (1, B)
        o_ref[0] = jnp.concatenate(rows, axis=0) + bf_ref[...]     # (2, B)

    return kernel


def deepfake_cnn_forward(x_nchw, wc, bc, wf, bf, *, batch_block=4):
    """x_nchw: (N, 3, H, W) f32; wc (COUT,CIN,3,3), bc (COUT,), wf (2,F), bf (2,)."""
    N, cin, H, W = x_nchw.shape
    assert cin == CIN and H % 2 == 0 and W % 2 == 0
    B = batch_block
    assert N % B == 0, "batch must be divisible by batch_block"
    HP, WP = H // 2, W // 2
    HW = H * W

    # ------------- wrapper-side layout glue (pure XLA, done once) -------------
    # im2col^T: cols[r, n*HW + h*W + w] = x_pad[n, h+kh, w+kw, cin],
    # with tap row r = (kh*3 + kw)*CIN + cin; rows 27..31 are zero padding.
    x_nhwc = jnp.transpose(x_nchw, (0, 2, 3, 1)).astype(jnp.bfloat16)
    x_pad = jnp.pad(x_nhwc, ((0, 0), (1, 1), (1, 1), (0, 0)))
    taps = jnp.stack([x_pad[:, kh:kh + H, kw:kw + W, :]
                      for kh in range(KH) for kw in range(KH)], axis=0)  # (9,N,H,W,CIN)
    cols = jnp.transpose(taps, (0, 4, 1, 2, 3)).reshape(KTAPS, N * HW)
    cols = jnp.pad(cols, ((0, KPAD - KTAPS), (0, 0)))                    # (32, N*HW) bf16

    # Conv weight OIHW -> (COUT, taps) with the same tap ordering, zero-padded.
    wct = jnp.transpose(wc, (0, 2, 3, 1)).reshape(COUT, KTAPS)
    wct = jnp.pad(wct, ((0, 0), (0, KPAD - KTAPS))).astype(jnp.bfloat16)
    bc_k = bc.reshape(COUT, 1).astype(jnp.float32)

    # torch FC weight (2, F), F index = c*HP*WP + hp*WP + wp  (NCHW flatten)
    #   -> scattered onto (c, h=2hp, w=2wp) with zeros elsewhere, then tiled
    #      along lanes for the B images of a tile.  Stays f32 (VPU multiply).
    wf_r = wf.reshape(2, COUT, HP, WP).astype(jnp.float32)
    wfs = jnp.zeros((2, COUT, H, W), jnp.float32).at[:, :, ::2, ::2].set(wf_r)
    wfs = jnp.tile(wfs.reshape(2, COUT, HW), (1, 1, B))                  # (2, COUT, B*HW)
    bf_k = bf.reshape(2, 1).astype(jnp.float32)

    out = pl.pallas_call(
        _make_fwd_kernel(B, H, W),
        out_shape=jax.ShapeDtypeStruct((N // B, 2, B), jnp.float32),
        grid=(N // B,),
        in_specs=[
            pl.BlockSpec((KPAD, B * HW), lambda n: (0, n)),      # im2col^T tile
            pl.BlockSpec((COUT, KPAD), lambda n: (0, 0)),        # conv weight^T
            pl.BlockSpec((COUT, 1), lambda n: (0, 0)),           # conv bias
            pl.BlockSpec((2, COUT, B * HW), lambda n: (0, 0, 0)),  # scattered FC weight
            pl.BlockSpec((2, 1), lambda n: (0, 0)),              # FC bias
        ],
        out_specs=pl.BlockSpec((1, 2, B), lambda n: (n, 0, 0)),
        compiler_params=pltpu.CompilerParams(
            dimension_semantics=("parallel",),
            vmem_limit_bytes=32 * 1024 * 1024),
    )(cols, wct, bc_k, wfs, bf_k)

    # (N//B, 2, B) -> (N, 2)
    return jnp.transpose(out, (0, 2, 1)).reshape(N, 2)


def reference_forward(x_nchw, wc, bc, wf, bf):
    """Pure-JAX reference with PyTorch semantics (NCHW, f32)."""
    y = lax.conv_general_dilated(
        x_nchw, wc, window_strides=(1, 1), padding="SAME",
        dimension_numbers=("NCHW", "OIHW", "NCHW"),
        precision=lax.Precision.HIGHEST)
    y = jnp.maximum(y + bc[None, :, None, None], 0.0)
    y = lax.reduce_window(y, -jnp.inf, lax.max,
                          window_dimensions=(1, 1, 2, 2),
                          window_strides=(1, 1, 2, 2), padding="VALID")
    flat = y.reshape(y.shape[0], -1)          # NCHW flatten == torch .view
    return jnp.dot(flat, wf.T, precision=lax.Precision.HIGHEST) + bf


if __name__ == "__main__":
    # N=8 with batch_block=4 -> grid length 2 (even: keeps both v7x cores busy).
    N, H, W = 8, 16, 16
    HP, WP = H // 2, W // 2
    F = COUT * HP * WP                        # "_to_linear" at this toy size

    key = jax.random.PRNGKey(0)
    kx, kw1, kb1, kw2, kb2 = jax.random.split(key, 5)
    x = jax.random.normal(kx, (N, CIN, H, W), jnp.float32)
    conv_w = jax.random.normal(kw1, (COUT, CIN, KH, KH), jnp.float32) * 0.1
    conv_b = jax.random.normal(kb1, (COUT,), jnp.float32) * 0.1
    fc_w = jax.random.normal(kw2, (2, F), jnp.float32) * 0.05
    fc_b = jax.random.normal(kb2, (2,), jnp.float32) * 0.05

    out = jax.block_until_ready(
        deepfake_cnn_forward(x, conv_w, conv_b, fc_w, fc_b, batch_block=4))
    ref = jax.block_until_ready(reference_forward(x, conv_w, conv_b, fc_w, fc_b))

    assert out.shape == (N, 2)
    if not np.allclose(np.asarray(out), np.asarray(ref), atol=5e-2, rtol=5e-2):
        raise AssertionError(
            "mismatch vs reference, max|diff|="
            f"{np.max(np.abs(np.asarray(out) - np.asarray(ref)))}")
    print("KERNEL_OK")
</pallas_src>

<mosaic_0001>
module attributes {stable_mosaic.version = 11 : i64} {
  func.func @kernel(%arg0: i32, %arg1: memref<32x1024xbf16, #tpu.memory_space<vmem>>, %arg2: memref<16x32xbf16, #tpu.memory_space<vmem>>, %arg3: memref<16x1xf32, #tpu.memory_space<vmem>>, %arg4: memref<2x16x1024xf32, #tpu.memory_space<vmem>>, %arg5: memref<2x1xf32, #tpu.memory_space<vmem>>, %arg6: memref<1x2x4xf32, #tpu.memory_space<vmem>>) attributes {dimension_semantics = [#tpu.dimension_semantics<parallel>], iteration_bounds = array<i64: 2>, scalar_prefetch = 0 : i64, scratch_operands = 0 : i64, tpu.core_type = #tpu.core_type<tc>, window_params = [{transform_indices = @transform_0, window_bounds = array<i64: 32, 1024>}, {pipeline_mode = #tpu.pipeline_mode<synchronous>, transform_indices = @transform_1, window_bounds = array<i64: 16, 32>}, {pipeline_mode = #tpu.pipeline_mode<synchronous>, transform_indices = @transform_2, window_bounds = array<i64: 16, 1>}, {pipeline_mode = #tpu.pipeline_mode<synchronous>, transform_indices = @transform_3, window_bounds = array<i64: 2, 16, 1024>}, {pipeline_mode = #tpu.pipeline_mode<synchronous>, transform_indices = @transform_4, window_bounds = array<i64: 2, 1>}, {transform_indices = @transform_5, window_bounds = array<i64: 1, 2, 4>}]} {
    %c0 = arith.constant 0 : index
    %c0_0 = arith.constant 0 : index
    %0 = vector.load %arg2[%c0, %c0_0] : memref<16x32xbf16, #tpu.memory_space<vmem>>, vector<16x32xbf16>
    %c0_1 = arith.constant 0 : index
    %c0_2 = arith.constant 0 : index
    %1 = vector.load %arg1[%c0_1, %c0_2] : memref<32x1024xbf16, #tpu.memory_space<vmem>>, vector<32x1024xbf16>
    %cst = arith.constant dense<0.000000e+00> : vector<16x1024xf32>
    %2 = tpu.matmul %0, %1, %cst {dimension_numbers = #tpu.dot_dimension_numbers<[1], [0], [0], [1], [0, 0, 1, 1], [], []>} : vector<16x32xbf16>, vector<32x1024xbf16>, vector<16x1024xf32> -> vector<16x1024xf32>
    %c0_3 = arith.constant 0 : index
    %c0_4 = arith.constant 0 : index
    %3 = vector.load %arg3[%c0_3, %c0_4] : memref<16x1xf32, #tpu.memory_space<vmem>>, vector<16x1xf32>
    %4 = vector.broadcast %3 : vector<16x1xf32> to vector<16x1024xf32>
    %5 = arith.addf %2, %4 : vector<16x1024xf32>
    %cst_5 = arith.constant 0.000000e+00 : f32
    %6 = vector.broadcast %cst_5 : f32 to vector<16x1024xf32>
    %7 = arith.maximumf %5, %6 : vector<16x1024xf32>
    %8 = vector.extract_strided_slice %7 {offsets = [0, 1], sizes = [16, 1023], strides = [1, 1]} : vector<16x1024xf32> to vector<16x1023xf32>
    %9 = vector.extract_strided_slice %7 {offsets = [0, 0], sizes = [16, 1], strides = [1, 1]} : vector<16x1024xf32> to vector<16x1xf32>
    %10 = tpu.concatenate %8, %9 in 1 : vector<16x1023xf32>, vector<16x1xf32> -> vector<16x1024xf32>
    %11 = arith.maximumf %7, %10 : vector<16x1024xf32>
    %12 = vector.extract_strided_slice %11 {offsets = [0, 16], sizes = [16, 1008], strides = [1, 1]} : vector<16x1024xf32> to vector<16x1008xf32>
    %13 = vector.extract_strided_slice %11 {offsets = [0, 0], sizes = [16, 16], strides = [1, 1]} : vector<16x1024xf32> to vector<16x16xf32>
    %14 = tpu.concatenate %12, %13 in 1 : vector<16x1008xf32>, vector<16x16xf32> -> vector<16x1024xf32>
    %15 = arith.maximumf %11, %14 : vector<16x1024xf32>
    %c0_6 = arith.constant 0 : index
    %c0_7 = arith.constant 0 : index
    %c0_8 = arith.constant 0 : index
    %16 = vector.load %arg4[%c0_6, %c0_7, %c0_8] : memref<2x16x1024xf32, #tpu.memory_space<vmem>>, vector<1x16x1024xf32>
    %17 = vector.shape_cast %16 : vector<1x16x1024xf32> to vector<16x1024xf32>
    %18 = arith.mulf %15, %17 : vector<16x1024xf32>
    %cst_9 = arith.constant dense<0.000000e+00> : vector<1024xf32>
    %19 = vector.multi_reduction <add>, %18, %cst_9 [0] : vector<16x1024xf32> to vector<1024xf32>
    %20 = vector.shape_cast %19 : vector<1024xf32> to vector<1x1024xf32>
    %21 = vector.extract_strided_slice %20 {offsets = [0, 0], sizes = [1, 256], strides = [1, 1]} : vector<1x1024xf32> to vector<1x256xf32>
    %cst_10 = arith.constant dense<0.000000e+00> : vector<1xf32>
    %22 = vector.multi_reduction <add>, %21, %cst_10 [1] : vector<1x256xf32> to vector<1xf32>
    %23 = vector.shape_cast %22 : vector<1xf32> to vector<1x1xf32>
    %24 = vector.extract_strided_slice %20 {offsets = [0, 256], sizes = [1, 256], strides = [1, 1]} : vector<1x1024xf32> to vector<1x256xf32>
    %cst_11 = arith.constant dense<0.000000e+00> : vector<1xf32>
    %25 = vector.multi_reduction <add>, %24, %cst_11 [1] : vector<1x256xf32> to vector<1xf32>
    %26 = vector.shape_cast %25 : vector<1xf32> to vector<1x1xf32>
    %27 = vector.extract_strided_slice %20 {offsets = [0, 512], sizes = [1, 256], strides = [1, 1]} : vector<1x1024xf32> to vector<1x256xf32>
    %cst_12 = arith.constant dense<0.000000e+00> : vector<1xf32>
    %28 = vector.multi_reduction <add>, %27, %cst_12 [1] : vector<1x256xf32> to vector<1xf32>
    %29 = vector.shape_cast %28 : vector<1xf32> to vector<1x1xf32>
    %30 = vector.extract_strided_slice %20 {offsets = [0, 768], sizes = [1, 256], strides = [1, 1]} : vector<1x1024xf32> to vector<1x256xf32>
    %cst_13 = arith.constant dense<0.000000e+00> : vector<1xf32>
    %31 = vector.multi_reduction <add>, %30, %cst_13 [1] : vector<1x256xf32> to vector<1xf32>
    %32 = vector.shape_cast %31 : vector<1xf32> to vector<1x1xf32>
    %33 = tpu.concatenate %23, %26, %29, %32 in 1 : vector<1x1xf32>, vector<1x1xf32>, vector<1x1xf32>, vector<1x1xf32> -> vector<1x4xf32>
    %c1 = arith.constant 1 : index
    %c0_14 = arith.constant 0 : index
    %c0_15 = arith.constant 0 : index
    %34 = vector.load %arg4[%c1, %c0_14, %c0_15] : memref<2x16x1024xf32, #tpu.memory_space<vmem>>, vector<1x16x1024xf32>
    %35 = vector.shape_cast %34 : vector<1x16x1024xf32> to vector<16x1024xf32>
    %36 = arith.mulf %15, %35 : vector<16x1024xf32>
    %cst_16 = arith.constant dense<0.000000e+00> : vector<1024xf32>
    %37 = vector.multi_reduction <add>, %36, %cst_16 [0] : vector<16x1024xf32> to vector<1024xf32>
    %38 = vector.shape_cast %37 : vector<1024xf32> to vector<1x1024xf32>
    %39 = vector.extract_strided_slice %38 {offsets = [0, 0], sizes = [1, 256], strides = [1, 1]} : vector<1x1024xf32> to vector<1x256xf32>
    %cst_17 = arith.constant dense<0.000000e+00> : vector<1xf32>
    %40 = vector.multi_reduction <add>, %39, %cst_17 [1] : vector<1x256xf32> to vector<1xf32>
    %41 = vector.shape_cast %40 : vector<1xf32> to vector<1x1xf32>
    %42 = vector.extract_strided_slice %38 {offsets = [0, 256], sizes = [1, 256], strides = [1, 1]} : vector<1x1024xf32> to vector<1x256xf32>
    %cst_18 = arith.constant dense<0.000000e+00> : vector<1xf32>
    %43 = vector.multi_reduction <add>, %42, %cst_18 [1] : vector<1x256xf32> to vector<1xf32>
    %44 = vector.shape_cast %43 : vector<1xf32> to vector<1x1xf32>
    %45 = vector.extract_strided_slice %38 {offsets = [0, 512], sizes = [1, 256], strides = [1, 1]} : vector<1x1024xf32> to vector<1x256xf32>
    %cst_19 = arith.constant dense<0.000000e+00> : vector<1xf32>
    %46 = vector.multi_reduction <add>, %45, %cst_19 [1] : vector<1x256xf32> to vector<1xf32>
    %47 = vector.shape_cast %46 : vector<1xf32> to vector<1x1xf32>
    %48 = vector.extract_strided_slice %38 {offsets = [0, 768], sizes = [1, 256], strides = [1, 1]} : vector<1x1024xf32> to vector<1x256xf32>
    %cst_20 = arith.constant dense<0.000000e+00> : vector<1xf32>
    %49 = vector.multi_reduction <add>, %48, %cst_20 [1] : vector<1x256xf32> to vector<1xf32>
    %50 = vector.shape_cast %49 : vector<1xf32> to vector<1x1xf32>
    %51 = tpu.concatenate %41, %44, %47, %50 in 1 : vector<1x1xf32>, vector<1x1xf32>, vector<1x1xf32>, vector<1x1xf32> -> vector<1x4xf32>
    %52 = tpu.concatenate %33, %51 in 0 : vector<1x4xf32>, vector<1x4xf32> -> vector<2x4xf32>
    %c0_21 = arith.constant 0 : index
    %c0_22 = arith.constant 0 : index
    %53 = vector.load %arg5[%c0_21, %c0_22] : memref<2x1xf32, #tpu.memory_space<vmem>>, vector<2x1xf32>
    %54 = vector.broadcast %53 : vector<2x1xf32> to vector<2x4xf32>
    %55 = arith.addf %52, %54 : vector<2x4xf32>
    %c0_23 = arith.constant 0 : index
    %c0_24 = arith.constant 0 : index
    %c0_25 = arith.constant 0 : index
    %56 = vector.load %arg6[%c0_23, %c0_24, %c0_25] : memref<1x2x4xf32, #tpu.memory_space<vmem>>, vector<1x2x4xf32>
    %57 = vector.shape_cast %56 : vector<1x2x4xf32> to vector<2x4xf32>
    %58 = vector.shape_cast %55 : vector<2x4xf32> to vector<1x2x4xf32>
    tpu.vector_store %arg6[%c0_23, %c0_24, %c0_25], %58 {strides = array<i32>} : memref<1x2x4xf32, #tpu.memory_space<vmem>>, vector<1x2x4xf32>,
    return
  }
  func.func @transform_0(%arg0: i32) -> (i32, i32) {
    %c0_i32 = arith.constant 0 : i32
    %c0_i32_0 = arith.constant 0 : i32
    return %c0_i32, %arg0 : i32, i32
  }
  func.func @transform_1(%arg0: i32) -> (i32, i32) {
    %c0_i32 = arith.constant 0 : i32
    %c0_i32_0 = arith.constant 0 : i32
    %c0_i32_1 = arith.constant 0 : i32
    return %c0_i32, %c0_i32_0 : i32, i32
  }
  func.func @transform_2(%arg0: i32) -> (i32, i32) {
    %c0_i32 = arith.constant 0 : i32
    %c0_i32_0 = arith.constant 0 : i32
    %c0_i32_1 = arith.constant 0 : i32
    return %c0_i32, %c0_i32_0 : i32, i32
  }
  func.func @transform_3(%arg0: i32) -> (i32, i32, i32) {
    %c0_i32 = arith.constant 0 : i32
    %c0_i32_0 = arith.constant 0 : i32
    %c0_i32_1 = arith.constant 0 : i32
    %c0_i32_2 = arith.constant 0 : i32
    return %c0_i32, %c0_i32_0, %c0_i32_1 : i32, i32, i32
  }
  func.func @transform_4(%arg0: i32) -> (i32, i32) {
    %c0_i32 = arith.constant 0 : i32
    %c0_i32_0 = arith.constant 0 : i32
    %c0_i32_1 = arith.constant 0 : i32
    return %c0_i32, %c0_i32_0 : i32, i32
  }
  func.func @transform_5(%arg0: i32) -> (i32, i32, i32) {
    %c0_i32 = arith.constant 0 : i32
    %c0_i32_0 = arith.constant 0 : i32
    %c0_i32_1 = arith.constant 0 : i32
    return %arg0, %c0_i32, %c0_i32_0 : i32, i32, i32
  }
}

</mosaic_0001>

<llo_original>
// kernel: tpu_custom_call.1
$region0: #{tpu_custom_call.1}
  #allocation0 [shape = 'u32[]', space=smem, size = 0x4, offset = 0x4, fixed_abs, tag = 'smem constant byte address 0x4 - core index']
  #allocation1 [shape = 'u32[144,128]{1,0:T(1,128)}', space=vmem, size = 0x12000, scoped, tag = 'internal scratch']
  %s0 = inlined_call_operand.hbm [shape: bf16[32,2048], index: 0, kind: input, shape index: {}]
  %s1 = inlined_call_operand.vmem [shape: bf16[16,32], index: 1, kind: input, shape index: {}]
  %s2 = inlined_call_operand.vmem [shape: f32[16,1], index: 2, kind: input, shape index: {}]
  %s3 = inlined_call_operand.hbm [shape: f32[2,16,1024], index: 3, kind: input, shape index: {}]
  %s4 = inlined_call_operand.vmem [shape: f32[2,1], index: 4, kind: input, shape index: {}]
  %s5 = inlined_call_operand.hbm [shape: f32[2,2,4], index: 5, kind: output, shape index: {}]
  %s6 = sld [smem:[#allocation0]]
  $region61: #{tpu_custom_call.1} parent=0
    _
  %s8 = ssub.s32 1, %s6
  %s9 = scalar_select 0, %s8, %s6
  $region1: #{tpu_custom_call.1} parent=0
    #allocation2 [shape = 'u8[131072]{0}', space=vmem, size = 0x20000, scoped, tag = 'input window, operand 0']
    #allocation3 [shape = 's32[2]{0}', space=sflag, size = 0x8, scoped, tag = 'scoped memory for tpu_custom_call.1']
    #allocation4 [shape = 's32[2]{0}', space=sflag, size = 0x8, scoped, tag = 'scoped memory for tpu_custom_call.1']
    #allocation5 [shape = 'u8[131072]{0}', space=vmem, size = 0x20000, scoped, tag = 'input window, operand 3, single buffered']
    #allocation6 [shape = 's32[1]{0}', space=sflag, size = 0x4, scoped, tag = 'scoped memory for tpu_custom_call.1']
    #allocation7 [shape = 'u8[2048]{0}', space=vmem, size = 0x800, scoped, tag = 'output window, operand 0']
    %10 = vsyncpa [#allocation3], 0
    %s11 = scalar_lea.sflag [#allocation3], 1
    %12 = vsyncpa %s11, 0
    %13 = vsyncpa [#allocation6], 0
    %14 = vsyncpa [#allocation4], 0
    %s15 = scalar_lea.sflag [#allocation4], 1
    %16 = vsyncpa %s15, 0
    loop: start=0, step=1, limit=4
    $region2: #{tpu_custom_call.1} parent=1 // loop_pre_header
      _
    $region3: #{tpu_custom_call.1} parent=1 // loop_header
      %s18 = sphi 0, %s22
      %p19 = scmp.ge.s32.totalorder %s18, 4
      %s28 = sphi 0, %s30
      %s31 = sphi 0, %s28
      %s32 = sphi 0, %s31
      %s48 = sphi 0, %s32
      %s52 = sphi 0, %s52
      %s54 = sphi 0, %s52
      %s55 = sphi 0, %s54
      %s69 = sphi 0, %s55
      %s73 = sphi 0, %s73
      %s75 = sphi 0, %s73
      %s76 = sphi 0, %s75
      %s90 = sphi 0, %s76
      %s94 = sphi 0, %s94
      %s96 = sphi 0, %s94
      %s97 = sphi 0, %s96
      %s111 = sphi 0, %s97
      %s115 = sphi 0, %s115
      %s117 = sphi 0, %s115
      %s118 = sphi 0, %s117
      %s132 = sphi 0, %s118
      %s138 = sphi 0, %s140
      %s141 = sphi 0, %s138
      %s142 = sphi 0, %s141
      %s158 = sphi 0, %s142
    $region4: #{tpu_custom_call.1} parent=1 // loop_header_branch
      %21 = sbr.rel (%p19) target = $region8
    $region5: #{tpu_custom_call.1} parent=1 // loop_body
      %s23 = ssub.s32 %s18, 1
      %s24 = ssub.s32 %s18, 2
      %s25 = sadd.s32 %s18, 1
      %s26 = ssub.s32 %s18, %s25
      %p27 = scmp.eq.s32.totalorder %s26, 0
      %s29 = sadd.s32 %s28, 1
      %s30 = scalar_select %p27, %s28, %s29
      %p33 = pneg %p27
      %p34 = scmp.eq.s32.totalorder %s18, 1
      %p35 = por %p33, %p34
      %p36 = scmp.ne.s32.totalorder %s28, %s31
      %p37 = scmp.eq.s32.totalorder %s18, 0
      %p38 = por %p36, %p37
      %p39 = scmp.ne.s32.totalorder %s28, %s31
      %p40 = scmp.eq.s32.totalorder %s23, 1
      %p41 = por %p39, %p40
      %p42 = scmp.ne.s32.totalorder %s31, %s32
      %p43 = scmp.eq.s32.totalorder %s23, 0
      %p44 = por %p42, %p43
      %p45 = scmp.ne.s32.totalorder %s31, %s32
      %p46 = scmp.eq.s32.totalorder %s24, 1
      %p47 = por %p45, %p46
      %p49 = scmp.ne.s32.totalorder %s32, %s48
      %p50 = scmp.eq.s32.totalorder %s24, 0
      %p51 = por %p49, %p50
      %s53 = sadd.s32 %s52, 1
      %p56 = scmp.eq.s32.totalorder %s18, 1
      %p57 = scmp.ne.s32.totalorder %s52, %s54
      %p58 = scmp.eq.s32.totalorder %s18, 0
      %p59 = por %p57, %p58
      %p60 = scmp.ne.s32.totalorder %s52, %s54
      %p61 = scmp.eq.s32.totalorder %s23, 1
      %p62 = por %p60, %p61
      %p63 = scmp.ne.s32.totalorder %s54, %s55
      %p64 = scmp.eq.s32.totalorder %s23, 0
      %p65 = por %p63, %p64
      %p66 = scmp.ne.s32.totalorder %s54, %s55
      %p67 = scmp.eq.s32.totalorder %s24, 1
      %p68 = por %p66, %p67
      %p70 = scmp.ne.s32.totalorder %s55, %s69
      %p71 = scmp.eq.s32.totalorder %s24, 0
      %p72 = por %p70, %p71
      %s74 = sadd.s32 %s73, 1
      %p77 = scmp.eq.s32.totalorder %s18, 1
      %p78 = scmp.ne.s32.totalorder %s73, %s75
      %p79 = scmp.eq.s32.totalorder %s18, 0
      %p80 = por %p78, %p79
      %p81 = scmp.ne.s32.totalorder %s73, %s75
      %p82 = scmp.eq.s32.totalorder %s23, 1
      %p83 = por %p81, %p82
      %p84 = scmp.ne.s32.totalorder %s75, %s76
      %p85 = scmp.eq.s32.totalorder %s23, 0
      %p86 = por %p84, %p85
      %p87 = scmp.ne.s32.totalorder %s75, %s76
      %p88 = scmp.eq.s32.totalorder %s24, 1
      %p89 = por %p87, %p88
      %p91 = scmp.ne.s32.totalorder %s76, %s90
      %p92 = scmp.eq.s32.totalorder %s24, 0
      %p93 = por %p91, %p92
      %s95 = sadd.s32 %s94, 1
      %p98 = scmp.eq.s32.totalorder %s18, 1
      %p99 = scmp.ne.s32.totalorder %s94, %s96
      %p100 = scmp.eq.s32.totalorder %s18, 0
      %p101 = por %p99, %p100
      %p102 = scmp.ne.s32.totalorder %s94, %s96
      %p103 = scmp.eq.s32.totalorder %s23, 1
      %p104 = por %p102, %p103
      %p105 = scmp.ne.s32.totalorder %s96, %s97
      %p106 = scmp.eq.s32.totalorder %s23, 0
      %p107 = por %p105, %p106
      %p108 = scmp.ne.s32.totalorder %s96, %s97
      %p109 = scmp.eq.s32.totalorder %s24, 1
      %p110 = por %p108, %p109
      %p112 = scmp.ne.s32.totalorder %s97, %s111
      %p113 = scmp.eq.s32.totalorder %s24, 0
      %p114 = por %p112, %p113
      %s116 = sadd.s32 %s115, 1
      %p119 = scmp.eq.s32.totalorder %s18, 1
      %p120 = scmp.ne.s32.totalorder %s115, %s117
      %p121 = scmp.eq.s32.totalorder %s18, 0
      %p122 = por %p120, %p121
      %p123 = scmp.ne.s32.totalorder %s115, %s117
      %p124 = scmp.eq.s32.totalorder %s23, 1
      %p125 = por %p123, %p124
      %p126 = scmp.ne.s32.totalorder %s117, %s118
      %p127 = scmp.eq.s32.totalorder %s23, 0
      %p128 = por %p126, %p127
      %p129 = scmp.ne.s32.totalorder %s117, %s118
      %p130 = scmp.eq.s32.totalorder %s24, 1
      %p131 = por %p129, %p130
      %p133 = scmp.ne.s32.totalorder %s118, %s132
      %p134 = scmp.eq.s32.totalorder %s24, 0
      %p135 = por %p133, %p134
      %s136 = ssub.s32 %s18, %s25
      %p137 = scmp.eq.s32.totalorder %s136, 0
      %s139 = sadd.s32 %s138, 1
      %s140 = scalar_select %p137, %s138, %s139
      %p143 = pneg %p137
      %p144 = scmp.eq.s32.totalorder %s18, 1
      %p145 = por %p143, %p144
      %p146 = scmp.ne.s32.totalorder %s138, %s141
      %p147 = scmp.eq.s32.totalorder %s18, 0
      %p148 = por %p146, %p147
      %p149 = scmp.ne.s32.totalorder %s138, %s141
      %p150 = scmp.eq.s32.totalorder %s23, 1
      %p151 = por %p149, %p150
      %p152 = scmp.ne.s32.totalorder %s141, %s142
      %p153 = scmp.eq.s32.totalorder %s23, 0
      %p154 = por %p152, %p153
      %p155 = scmp.ne.s32.totalorder %s141, %s142
      %p156 = scmp.eq.s32.totalorder %s24, 1
      %p157 = por %p155, %p156
      %p159 = scmp.ne.s32.totalorder %s142, %s158
      %p160 = scmp.eq.s32.totalorder %s24, 0
      %p161 = por %p159, %p160
      %p162 = scmp.le.s32.totalorder 1, %s18
      %p163 = scmp.lt.s32.totalorder %s18, 3
      %p164 = pnand %p162, %p163
      %p165 = pneg %p164
      // Predicated region
      $region9: #{tpu_custom_call.1} parent=5 // pred_check
        _
      $region10: #{tpu_custom_call.1} parent=5 // pred_check_branch
        %167 = sbr.rel (%p164) target = $region12
      $region11: #{tpu_custom_call.1} parent=5 // pred_region
        %s168 = ssub.s32 %s18, 1
        // Predicated region
        $region13: #{tpu_custom_call.1} parent=11 // pred_check
          %p169 = pneg %p65
        $region14: #{tpu_custom_call.1} parent=11 // pred_check_branch
          %171 = sbr.rel (%p169) target = $region16
        $region15: #{tpu_custom_call.1} parent=11 // pred_region
          _
        $region16: #{tpu_custom_call.1} parent=11 // pred_fallthru
          _
        // Predicated region
        $region17: #{tpu_custom_call.1} parent=11 // pred_check
          %p172 = pneg %p86
        $region18: #{tpu_custom_call.1} parent=11 // pred_check_branch
          %174 = sbr.rel (%p172) target = $region20
        $region19: #{tpu_custom_call.1} parent=11 // pred_region
          _
        $region20: #{tpu_custom_call.1} parent=11 // pred_fallthru
          _
        // Predicated region
        $region21: #{tpu_custom_call.1} parent=11 // pred_check
          %p175 = pneg %p107
        $region22: #{tpu_custom_call.1} parent=11 // pred_check_branch
          %177 = sbr.rel (%p175) target = $region24
        $region23: #{tpu_custom_call.1} parent=11 // pred_region
          %s179 = ssub.s32 4096, 4096
          %180 = vsyncadd [#allocation6], %s179
          %s181 = sshll.u32 [#allocation5], 4
          %s182 = int_to_ptr.vmem [resolvable:$true] %s181
          %187 = dma.hbm_to_vmem [thread:$0]  %s3, 4096, %s182, [#allocation6], 1024, 1024, 64
        $region24: #{tpu_custom_call.1} parent=11 // pred_fallthru
          _
        // Predicated region
        $region25: #{tpu_custom_call.1} parent=11 // pred_check
          %p188 = pneg %p128
        $region26: #{tpu_custom_call.1} parent=11 // pred_check_branch
          %190 = sbr.rel (%p188) target = $region28
        $region27: #{tpu_custom_call.1} parent=11 // pred_region
          _
        $region28: #{tpu_custom_call.1} parent=11 // pred_fallthru
          _
      $region12: #{tpu_custom_call.1} parent=5 // pred_fallthru
        _
      %p191 = scmp.lt.s32.totalorder %s18, 2
      // Predicated region
      $region29: #{tpu_custom_call.1} parent=5 // pred_check
        %p192 = pneg %p191
      $region30: #{tpu_custom_call.1} parent=5 // pred_check_branch
        %194 = sbr.rel (%p192) target = $region32
      $region31: #{tpu_custom_call.1} parent=5 // pred_region
        // Predicated region
        $region33: #{tpu_custom_call.1} parent=31 // pred_check
          %p195 = pneg %p38
        $region34: #{tpu_custom_call.1} parent=31 // pred_check_branch
          %197 = sbr.rel (%p195) target = $region36
        $region35: #{tpu_custom_call.1} parent=31 // pred_region
          %s198 = sand.u32 %s28, 1
          %s199 = scalar_lea.sflag [#allocation3], %s198
          %s200 = sand.u32 %s28, 1
          %s201 = smul.addr %s200, 128
          %s202 = scalar_lea.vmem [#allocation2], %s201
          %s203 = smul.u32 8, %s18
          %s205 = ssub.s32 2048, 2048
          %206 = vsyncadd %s199, %s205
          %s207 = smul.addr %s203, 64
          %s208 = scalar_lea.hbm %s0, %s207
          %s209 = sshll.u32 %s202, 4
          %s210 = int_to_ptr.vmem [resolvable:$true] %s209
          %215 = dma.hbm_to_vmem [thread:$0]  %s208, 2048, %s210, %s199, 1024, 512, 32
        $region36: #{tpu_custom_call.1} parent=31 // pred_fallthru
          _
      $region32: #{tpu_custom_call.1} parent=5 // pred_fallthru
        _
      %p216 = scmp.le.s32.totalorder 1, %s18
      %p217 = scmp.lt.s32.totalorder %s18, 3
      %p218 = pnand %p216, %p217
      %p219 = pneg %p218
      // Predicated region
      $region37: #{tpu_custom_call.1} parent=5 // pred_check
        _
      $region38: #{tpu_custom_call.1} parent=5 // pred_check_branch
        %221 = sbr.rel (%p218) target = $region40
      $region39: #{tpu_custom_call.1} parent=5 // pred_region
        %s222 = ssub.s32 %s18, 1
        %s223 = sand.u32 %s31, 1
        %s224 = scalar_lea.sflag [#allocation3], %s223
        %s225 = sand.u32 %s31, 1
        %s226 = smul.addr %s225, 128
        %s227 = scalar_lea.vmem [#allocation2], %s226
        // Predicated region
        $region41: #{tpu_custom_call.1} parent=39 // pred_check
          %p228 = pneg %p44
        $region42: #{tpu_custom_call.1} parent=39 // pred_check_branch
          %230 = sbr.rel (%p228) target = $region44
        $region43: #{tpu_custom_call.1} parent=39 // pred_region
          %231 = dma.done %s224, 2048
        $region44: #{tpu_custom_call.1} parent=39 // pred_fallthru
          _
        // Predicated region
        $region45: #{tpu_custom_call.1} parent=39 // pred_check
          %p232 = pneg %p107
        $region46: #{tpu_custom_call.1} parent=39 // pred_check_branch
          %234 = sbr.rel (%p232) target = $region48
        $region47: #{tpu_custom_call.1} parent=39 // pred_region
          %235 = dma.done [#allocation6], 4096
        $region48: #{tpu_custom_call.1} parent=39 // pred_fallthru
          _
        %s236 = sand.u32 %s31, 1
        %s237 = scalar_lea.sflag [#allocation3], %s236
        %s238 = sand.u32 %s31, 1
        %s239 = smul.addr %s238, 128
        %s240 = scalar_lea.vmem [#allocation2], %s239
        %p241 = pneg %p44
        %p242 = pneg %p41
        %p243 = pneg %p65
        %p244 = pneg %p62
        %p245 = pneg %p86
        %p246 = pneg %p83
        %p247 = pneg %p107
        %p248 = pneg %p104
        %p249 = pneg %p128
        %p250 = pneg %p125
        %p251 = pneg %p154
        %p252 = pneg %p151
        %s253 = sand.u32 %s141, 1
        %s254 = scalar_lea.sflag [#allocation4], %s253
        %s255 = sand.u32 %s141, 1
        %s256 = smul.addr %s255, 2
        %s257 = scalar_lea.vmem [#allocation7], %s256
        %s258 = smul.u32 8, %s23
        %v260 = vld [vmem:[%s1] sm:$0xf]
        %v261 = vld [vmem:[%s1 + $0x4] sm:$0xf]
        %v262 = vld [vmem:[%s227] sm:$0xff]
        %v263 = vld [vmem:[%s227 + $0x8] sm:$0xff]
        %v264 = vld [vmem:[%s227 + $0x10] sm:$0xff]
        %v265 = vld [vmem:[%s227 + $0x18] sm:$0xff]
        %v266 = vld [vmem:[%s227 + $0x20] sm:$0xff]
        %v267 = vld [vmem:[%s227 + $0x28] sm:$0xff]
        %v268 = vld [vmem:[%s227 + $0x30] sm:$0xff]
        %v269 = vld [vmem:[%s227 + $0x38] sm:$0xff]
        %v270 = vld [vmem:[%s227 + $0x40] sm:$0xff]
        %v271 = vld [vmem:[%s227 + $0x48] sm:$0xff]
        %v272 = vld [vmem:[%s227 + $0x50] sm:$0xff]
        %v273 = vld [vmem:[%s227 + $0x58] sm:$0xff]
        %v274 = vld [vmem:[%s227 + $0x60] sm:$0xff]
        %v275 = vld [vmem:[%s227 + $0x68] sm:$0xff]
        %v276 = vld [vmem:[%s227 + $0x70] sm:$0xff]
        %v277 = vld [vmem:[%s227 + $0x78] sm:$0xff]
        %v278 = vld [vmem:[%s2] sm:$0xff]
        %v279 = vld [vmem:[%s2 + $0x8] sm:$0xff]
        %281 = vset.pattern.permute.xlu0 0
        %282 = vperm.xlu0 %281, %v278
        %v283 = vpop.permute.xlu0 %282
        %286 = vset.pattern.permute.xlu0 0
        %287 = vperm.xlu0 %286, %v279
        %v288 = vpop.permute.xlu0 %287
        %v292 = vunpack.c.l.b16 %v260
        %v293 = vunpack.c.l.b16 %v261
        %v294 = vpack.c.b16 %v293, %v292
        %v311 = vunpack.c.l.b16 %v262
        %v312 = vunpack.c.h.b16 %v262
        %v313 = vunpack.c.l.b16 %v263
        %v314 = vunpack.c.h.b16 %v263
        %v315 = vunpack.c.l.b16 %v264
        %v316 = vunpack.c.h.b16 %v264
        %v317 = vunpack.c.l.b16 %v265
        %v318 = vunpack.c.h.b16 %v265
        %v319 = vunpack.c.l.b16 %v266
        %v320 = vunpack.c.h.b16 %v266
        %v321 = vunpack.c.l.b16 %v267
        %v322 = vunpack.c.h.b16 %v267
        %v323 = vunpack.c.l.b16 %v268
        %v324 = vunpack.c.h.b16 %v268
        %v325 = vunpack.c.l.b16 %v269
        %v326 = vunpack.c.h.b16 %v269
        %v327 = vunpack.c.l.b16 %v270
        %v328 = vunpack.c.h.b16 %v270
        %v329 = vunpack.c.l.b16 %v271
        %v330 = vunpack.c.h.b16 %v271
        %v331 = vunpack.c.l.b16 %v272
        %v332 = vunpack.c.h.b16 %v272
        %v333 = vunpack.c.l.b16 %v273
        %v334 = vunpack.c.h.b16 %v273
        %v335 = vunpack.c.l.b16 %v274
        %v336 = vunpack.c.h.b16 %v274
        %v337 = vunpack.c.l.b16 %v275
        %v338 = vunpack.c.h.b16 %v275
        %v339 = vunpack.c.l.b16 %v276
        %v340 = vunpack.c.h.b16 %v276
        %v341 = vunpack.c.l.b16 %v277
        %v342 = vunpack.c.h.b16 %v277
        %v343 = vpack.c.b16 %v319, %v311
        %v344 = vpack.c.b16 %v320, %v312
        %v345 = vpack.c.b16 %v321, %v313
        %v346 = vpack.c.b16 %v322, %v314
        %v347 = vpack.c.b16 %v323, %v315
        %v348 = vpack.c.b16 %v324, %v316
        %v349 = vpack.c.b16 %v325, %v317
        %v350 = vpack.c.b16 %v326, %v318
        %v351 = vpack.c.b16 %v335, %v327
        %v352 = vpack.c.b16 %v336, %v328
        %v353 = vpack.c.b16 %v337, %v329
        %v354 = vpack.c.b16 %v338, %v330
        %v355 = vpack.c.b16 %v339, %v331
        %v356 = vpack.c.b16 %v340, %v332
        %v357 = vpack.c.b16 %v341, %v333
        %v358 = vpack.c.b16 %v342, %v334
        %vm375 = vcmask 261120
        %v377 = vsel %vm375, %v294, 0
        %379 = vmatprep.subr.bf16.mxu0 0
        %380 = vmatpush1.bf16.msra.mxu0 0
        %381 = vmatprep.subr.bf16.mxu0 0
        %382 = vmatpush1.bf16.msra.mxu0 0
        %383 = vmatprep.subr.bf16.mxu0 0
        %384 = vmatpush1.bf16.msra.mxu0 0
        %385 = vmatprep.subr.bf16.mxu0 0
        %386 = vmatpush1.bf16.msra.mxu0 0
        %387 = vmatprep.subr.bf16.mxu0 0
        %388 = vmatpush1.bf16.msra.mxu0 0
        %389 = vmatprep.subr.bf16.mxu0 0
        %390 = vmatpush1.bf16.msra.mxu0 0
        %391 = vmatprep.subr.bf16.mxu0 %v352
        %392 = vmatpush1.bf16.msra.mxu0 %v351
        %393 = vmatprep.subr.bf16.mxu0 %v344
        %394 = vmatpush1.bf16.msra.mxu0 %v343
        %395 = vmatprep.subr.bf16.mxu0 0
        %396 = vmatpush2.bf16.msra.mxu0 0
        %397 = vmatprep.subr.bf16.mxu0 0
        %398 = vmatpush2.bf16.msra.mxu0 0
        %399 = vmatprep.subr.bf16.mxu0 0
        %400 = vmatpush2.bf16.msra.mxu0 0
        %401 = vmatprep.subr.bf16.mxu0 0
        %402 = vmatpush2.bf16.msra.mxu0 0
        %403 = vmatprep.subr.bf16.mxu0 0
        %404 = vmatpush2.bf16.msra.mxu0 0
        %405 = vmatprep.subr.bf16.mxu0 0
        %406 = vmatpush2.bf16.msra.mxu0 0
        %407 = vmatprep.subr.bf16.mxu0 0
        %408 = vmatpush2.bf16.msra.mxu0 0
        %409 = vmatprep.subr.bf16.mxu0 0
        %410 = vmatpush2.bf16.msra.mxu0 0
        %411 = vmatprep.mubr.bf16.mxu0 0
        %412 = vmatmul.mubr.bf16.gmra.mxu0 %v377
        %v413 = vpop.f32.mrf.mxu0
        %v414 = vadd.f32 %v283, %v413
        %v415 = vpop.f32.mrf.mxu0
        %v416 = vadd.f32 %v283, %v415
        %v417 = vpop.f32.mrf.mxu0
        %v418 = vadd.f32 %v288, %v417
        %v419 = vpop.f32.mrf.mxu0
        %v420 = vadd.f32 %v288, %v419
        %421 = vdwg.mxu0
        %422 = vmatprep.subr.bf16.mxu0 0
        %423 = vmatpush1.bf16.msra.mxu0 0
        %424 = vmatprep.subr.bf16.mxu0 0
        %425 = vmatpush1.bf16.msra.mxu0 0
        %426 = vmatprep.subr.bf16.mxu0 0
        %427 = vmatpush1.bf16.msra.mxu0 0
        %428 = vmatprep.subr.bf16.mxu0 0
        %429 = vmatpush1.bf16.msra.mxu0 0
        %430 = vmatprep.subr.bf16.mxu0 0
        %431 = vmatpush1.bf16.msra.mxu0 0
        %432 = vmatprep.subr.bf16.mxu0 0
        %433 = vmatpush1.bf16.msra.mxu0 0
        %434 = vmatprep.subr.bf16.mxu0 %v354
        %435 = vmatpush1.bf16.msra.mxu0 %v353
        %436 = vmatprep.subr.bf16.mxu0 %v346
        %437 = vmatpush1.bf16.msra.mxu0 %v345
        %438 = vmatprep.subr.bf16.mxu0 0
        %439 = vmatpush2.bf16.msra.mxu0 0
        %440 = vmatprep.subr.bf16.mxu0 0
        %441 = vmatpush2.bf16.msra.mxu0 0
        %442 = vmatprep.subr.bf16.mxu0 0
        %443 = vmatpush2.bf16.msra.mxu0 0
        %444 = vmatprep.subr.bf16.mxu0 0
        %445 = vmatpush2.bf16.msra.mxu0 0
        %446 = vmatprep.subr.bf16.mxu0 0
        %447 = vmatpush2.bf16.msra.mxu0 0
        %448 = vmatprep.subr.bf16.mxu0 0
        %449 = vmatpush2.bf16.msra.mxu0 0
        %450 = vmatprep.subr.bf16.mxu0 0
        %451 = vmatpush2.bf16.msra.mxu0 0
        %452 = vmatprep.subr.bf16.mxu0 0
        %453 = vmatpush2.bf16.msra.mxu0 0
        %454 = vmatprep.mubr.bf16.mxu0 0
        %455 = vmatmul.mubr.bf16.gmra.mxu0 %v377
        %v456 = vpop.f32.mrf.mxu0
        %v457 = vadd.f32 %v283, %v456
        %v458 = vpop.f32.mrf.mxu0
        %v459 = vadd.f32 %v283, %v458
        %v460 = vpop.f32.mrf.mxu0
        %v461 = vadd.f32 %v288, %v460
        %v462 = vpop.f32.mrf.mxu0
        %v463 = vadd.f32 %v288, %v462
        %464 = vdwg.mxu0
        %465 = vmatprep.subr.bf16.mxu0 0
        %466 = vmatpush1.bf16.msra.mxu0 0
        %467 = vmatprep.subr.bf16.mxu0 0
        %468 = vmatpush1.bf16.msra.mxu0 0
        %469 = vmatprep.subr.bf16.mxu0 0
        %470 = vmatpush1.bf16.msra.mxu0 0
        %471 = vmatprep.subr.bf16.mxu0 0
        %472 = vmatpush1.bf16.msra.mxu0 0
        %473 = vmatprep.subr.bf16.mxu0 0
        %474 = vmatpush1.bf16.msra.mxu0 0
        %475 = vmatprep.subr.bf16.mxu0 0
        %476 = vmatpush1.bf16.msra.mxu0 0
        %477 = vmatprep.subr.bf16.mxu0 %v356
        %478 = vmatpush1.bf16.msra.mxu0 %v355
        %479 = vmatprep.subr.bf16.mxu0 %v348
        %480 = vmatpush1.bf16.msra.mxu0 %v347
        %481 = vmatprep.subr.bf16.mxu0 0
        %482 = vmatpush2.bf16.msra.mxu0 0
        %483 = vmatprep.subr.bf16.mxu0 0
        %484 = vmatpush2.bf16.msra.mxu0 0
        %485 = vmatprep.subr.bf16.mxu0 0
        %486 = vmatpush2.bf16.msra.mxu0 0
        %487 = vmatprep.subr.bf16.mxu0 0
        %488 = vmatpush2.bf16.msra.mxu0 0
        %489 = vmatprep.subr.bf16.mxu0 0
        %490 = vmatpush2.bf16.msra.mxu0 0
        %491 = vmatprep.subr.bf16.mxu0 0
        %492 = vmatpush2.bf16.msra.mxu0 0
        %493 = vmatprep.subr.bf16.mxu0 0
        %494 = vmatpush2.bf16.msra.mxu0 0
        %495 = vmatprep.subr.bf16.mxu0 0
        %496 = vmatpush2.bf16.msra.mxu0 0
        %497 = vmatprep.mubr.bf16.mxu0 0
        %498 = vmatmul.mubr.bf16.gmra.mxu0 %v377
        %v499 = vpop.f32.mrf.mxu0
        %v500 = vadd.f32 %v283, %v499
        %v501 = vpop.f32.mrf.mxu0
        %v502 = vadd.f32 %v283, %v501
        %v503 = vpop.f32.mrf.mxu0
        %v504 = vadd.f32 %v288, %v503
        %v505 = vpop.f32.mrf.mxu0
        %v506 = vadd.f32 %v288, %v505
        %507 = vdwg.mxu0
        %508 = vmatprep.subr.bf16.mxu0 0
        %509 = vmatpush1.bf16.msra.mxu0 0
        %510 = vmatprep.subr.bf16.mxu0 0
        %511 = vmatpush1.bf16.msra.mxu0 0
        %512 = vmatprep.subr.bf16.mxu0 0
        %513 = vmatpush1.bf16.msra.mxu0 0
        %514 = vmatprep.subr.bf16.mxu0 0
        %515 = vmatpush1.bf16.msra.mxu0 0
        %516 = vmatprep.subr.bf16.mxu0 0
        %517 = vmatpush1.bf16.msra.mxu0 0
        %518 = vmatprep.subr.bf16.mxu0 0
        %519 = vmatpush1.bf16.msra.mxu0 0
        %520 = vmatprep.subr.bf16.mxu0 %v358
        %521 = vmatpush1.bf16.msra.mxu0 %v357
        %522 = vmatprep.subr.bf16.mxu0 %v350
        %523 = vmatpush1.bf16.msra.mxu0 %v349
        %524 = vmatprep.subr.bf16.mxu0 0
        %525 = vmatpush2.bf16.msra.mxu0 0
        %526 = vmatprep.subr.bf16.mxu0 0
        %527 = vmatpush2.bf16.msra.mxu0 0
        %528 = vmatprep.subr.bf16.mxu0 0
        %529 = vmatpush2.bf16.msra.mxu0 0
        %530 = vmatprep.subr.bf16.mxu0 0
        %531 = vmatpush2.bf16.msra.mxu0 0
        %532 = vmatprep.subr.bf16.mxu0 0
        %533 = vmatpush2.bf16.msra.mxu0 0
        %534 = vmatprep.subr.bf16.mxu0 0
        %535 = vmatpush2.bf16.msra.mxu0 0
        %536 = vmatprep.subr.bf16.mxu0 0
        %537 = vmatpush2.bf16.msra.mxu0 0
        %538 = vmatprep.subr.bf16.mxu0 0
        %539 = vmatpush2.bf16.msra.mxu0 0
        %540 = vmatprep.mubr.bf16.mxu0 0
        %541 = vmatmul.mubr.bf16.gmra.mxu0 %v377
        %v542 = vpop.f32.mrf.mxu0
        %v543 = vadd.f32 %v283, %v542
        %v544 = vpop.f32.mrf.mxu0
        %v545 = vadd.f32 %v283, %v544
        %v546 = vpop.f32.mrf.mxu0
        %v547 = vadd.f32 %v288, %v546
        %v548 = vpop.f32.mrf.mxu0
        %v549 = vadd.f32 %v288, %v548
        %550 = vdwg.mxu0
        %v551 = vmax.f32 %v414, 0.0
        %v552 = vmax.f32 %v416, 0.0
        %v553 = vmax.f32 %v457, 0.0
        %v554 = vmax.f32 %v459, 0.0
        %v555 = vmax.f32 %v500, 0.0
        %v556 = vmax.f32 %v502, 0.0
        %v557 = vmax.f32 %v543, 0.0
        %v558 = vmax.f32 %v545, 0.0
        %v559 = vmax.f32 %v418, 0.0
        %v560 = vmax.f32 %v420, 0.0
        %v561 = vmax.f32 %v461, 0.0
        %v562 = vmax.f32 %v463, 0.0
        %v563 = vmax.f32 %v504, 0.0
        %v564 = vmax.f32 %v506, 0.0
        %v565 = vmax.f32 %v547, 0.0
        %v566 = vmax.f32 %v549, 0.0
        %583 = vrot.lane.b32.xlu0 %v551, 127
        %v584 = vpop.permute.xlu0 %583
        %585 = vrot.lane.b32.xlu0 %v552, 127
        %v586 = vpop.permute.xlu0 %585
        %587 = vrot.lane.b32.xlu0 %v553, 127
        %v588 = vpop.permute.xlu0 %587
        %589 = vrot.lane.b32.xlu0 %v554, 127
        %v590 = vpop.permute.xlu0 %589
        %591 = vrot.lane.b32.xlu0 %v555, 127
        %v592 = vpop.permute.xlu0 %591
        %593 = vrot.lane.b32.xlu0 %v556, 127
        %v594 = vpop.permute.xlu0 %593
        %595 = vrot.lane.b32.xlu0 %v557, 127
        %v596 = vpop.permute.xlu0 %595
        %597 = vrot.lane.b32.xlu0 %v558, 127
        %v598 = vpop.permute.xlu0 %597
        %599 = vrot.lane.b32.xlu0 %v559, 127
        %v600 = vpop.permute.xlu0 %599
        %601 = vrot.lane.b32.xlu0 %v560, 127
        %v602 = vpop.permute.xlu0 %601
        %603 = vrot.lane.b32.xlu0 %v561, 127
        %v604 = vpop.permute.xlu0 %603
        %605 = vrot.lane.b32.xlu0 %v562, 127
        %v606 = vpop.permute.xlu0 %605
        %607 = vrot.lane.b32.xlu0 %v563, 127
        %v608 = vpop.permute.xlu0 %607
        %609 = vrot.lane.b32.xlu0 %v564, 127
        %v610 = vpop.permute.xlu0 %609
        %611 = vrot.lane.b32.xlu0 %v565, 127
        %v612 = vpop.permute.xlu0 %611
        %613 = vrot.lane.b32.xlu0 %v566, 127
        %v614 = vpop.permute.xlu0 %613
        %vm615 = vcmask 1039360
        %v616 = vsel %vm615, %v584, %v586
        %v617 = vsel %vm615, %v586, %v588
        %v618 = vsel %vm615, %v588, %v590
        %v619 = vsel %vm615, %v590, %v592
        %v620 = vsel %vm615, %v592, %v594
        %v621 = vsel %vm615, %v594, %v596
        %v622 = vsel %vm615, %v596, %v598
        %v623 = vsel %vm615, %v600, %v602
        %v624 = vsel %vm615, %v602, %v604
        %v625 = vsel %vm615, %v604, %v606
        %v626 = vsel %vm615, %v606, %v608
        %v627 = vsel %vm615, %v608, %v610
        %v628 = vsel %vm615, %v610, %v612
        %v629 = vsel %vm615, %v612, %v614
        %v648 = vsel %vm615, %v598, %v584
        %v649 = vsel %vm615, %v614, %v600
        %v650 = vmax.f32 %v551, %v616
        %v651 = vmax.f32 %v552, %v617
        %v652 = vmax.f32 %v553, %v618
        %v653 = vmax.f32 %v554, %v619
        %v654 = vmax.f32 %v555, %v620
        %v655 = vmax.f32 %v556, %v621
        %v656 = vmax.f32 %v557, %v622
        %v657 = vmax.f32 %v558, %v648
        %v658 = vmax.f32 %v559, %v623
        %v659 = vmax.f32 %v560, %v624
        %v660 = vmax.f32 %v561, %v625
        %v661 = vmax.f32 %v562, %v626
        %v662 = vmax.f32 %v563, %v627
        %v663 = vmax.f32 %v564, %v628
        %v664 = vmax.f32 %v565, %v629
        %v665 = vmax.f32 %v566, %v649
        %682 = vrot.lane.b32.xlu0 %v650, 112
        %v683 = vpop.permute.xlu0 %682
        %684 = vrot.lane.b32.xlu0 %v651, 112
        %v685 = vpop.permute.xlu0 %684
        %686 = vrot.lane.b32.xlu0 %v652, 112
        %v687 = vpop.permute.xlu0 %686
        %688 = vrot.lane.b32.xlu0 %v653, 112
        %v689 = vpop.permute.xlu0 %688
        %690 = vrot.lane.b32.xlu0 %v654, 112
        %v691 = vpop.permute.xlu0 %690
        %692 = vrot.lane.b32.xlu0 %v655, 112
        %v693 = vpop.permute.xlu0 %692
        %694 = vrot.lane.b32.xlu0 %v656, 112
        %v695 = vpop.permute.xlu0 %694
        %696 = vrot.lane.b32.xlu0 %v657, 112
        %v697 = vpop.permute.xlu0 %696
        %698 = vrot.lane.b32.xlu0 %v658, 112
        %v699 = vpop.permute.xlu0 %698
        %700 = vrot.lane.b32.xlu0 %v659, 112
        %v701 = vpop.permute.xlu0 %700
        %702 = vrot.lane.b32.xlu0 %v660, 112
        %v703 = vpop.permute.xlu0 %702
        %704 = vrot.lane.b32.xlu0 %v661, 112
        %v705 = vpop.permute.xlu0 %704
        %706 = vrot.lane.b32.xlu0 %v662, 112
        %v707 = vpop.permute.xlu0 %706
        %708 = vrot.lane.b32.xlu0 %v663, 112
        %v709 = vpop.permute.xlu0 %708
        %710 = vrot.lane.b32.xlu0 %v664, 112
        %v711 = vpop.permute.xlu0 %710
        %712 = vrot.lane.b32.xlu0 %v665, 112
        %v713 = vpop.permute.xlu0 %712
        %vm714 = vcmask 916480
        %v715 = vsel %vm714, %v683, %v685
        %v716 = vsel %vm714, %v685, %v687
        %v717 = vsel %vm714, %v687, %v689
        %v718 = vsel %vm714, %v689, %v691
        %v719 = vsel %vm714, %v691, %v693
        %v720 = vsel %vm714, %v693, %v695
        %v721 = vsel %vm714, %v695, %v697
        %v722 = vsel %vm714, %v699, %v701
        %v723 = vsel %vm714, %v701, %v703
        %v724 = vsel %vm714, %v703, %v705
        %v725 = vsel %vm714, %v705, %v707
        %v726 = vsel %vm714, %v707, %v709
        %v727 = vsel %vm714, %v709, %v711
        %v728 = vsel %vm714, %v711, %v713
        %v747 = vsel %vm714, %v697, %v683
        %v748 = vsel %vm714, %v713, %v699
        %v749 = vmax.f32 %v650, %v715
        %v750 = vmax.f32 %v651, %v716
        %v751 = vmax.f32 %v652, %v717
        %v752 = vmax.f32 %v653, %v718
        %v753 = vmax.f32 %v654, %v719
        %v754 = vmax.f32 %v655, %v720
        %v755 = vmax.f32 %v656, %v721
        %v756 = vmax.f32 %v657, %v747
        %v757 = vmax.f32 %v658, %v722
        %v758 = vmax.f32 %v659, %v723
        %v759 = vmax.f32 %v660, %v724
        %v760 = vmax.f32 %v661, %v725
        %v761 = vmax.f32 %v662, %v726
        %v762 = vmax.f32 %v663, %v727
        %v763 = vmax.f32 %v664, %v728
        %v764 = vmax.f32 %v665, %v748
        %v765 = vld [vmem:[#allocation5] sm:$0xff]
        %v766 = vld [vmem:[#allocation5 + $0x8] sm:$0xff]
        %v767 = vld [vmem:[#allocation5 + $0x10] sm:$0xff]
        %v768 = vld [vmem:[#allocation5 + $0x18] sm:$0xff]
        %v769 = vld [vmem:[#allocation5 + $0x20] sm:$0xff]
        %v770 = vld [vmem:[#allocation5 + $0x28] sm:$0xff]
        %v771 = vld [vmem:[#allocation5 + $0x30] sm:$0xff]
        %v772 = vld [vmem:[#allocation5 + $0x38] sm:$0xff]
        %v773 = vld [vmem:[#allocation5 + $0x40] sm:$0xff]
        %v774 = vld [vmem:[#allocation5 + $0x48] sm:$0xff]
        %v775 = vld [vmem:[#allocation5 + $0x50] sm:$0xff]
        %v776 = vld [vmem:[#allocation5 + $0x58] sm:$0xff]
        %v777 = vld [vmem:[#allocation5 + $0x60] sm:$0xff]
        %v778 = vld [vmem:[#allocation5 + $0x68] sm:$0xff]
        %v779 = vld [vmem:[#allocation5 + $0x70] sm:$0xff]
        %v780 = vld [vmem:[#allocation5 + $0x78] sm:$0xff]
        %v781 = vmul.f32 %v749, %v765
        %v782 = vmul.f32 %v750, %v766
        %v783 = vmul.f32 %v751, %v767
        %v784 = vmul.f32 %v752, %v768
        %v785 = vmul.f32 %v753, %v769
        %v786 = vmul.f32 %v754, %v770
        %v787 = vmul.f32 %v755, %v771
        %v788 = vmul.f32 %v756, %v772
        %v789 = vmul.f32 %v757, %v773
        %v790 = vmul.f32 %v758, %v774
        %v791 = vmul.f32 %v759, %v775
        %v792 = vmul.f32 %v760, %v776
        %v793 = vmul.f32 %v761, %v777
        %v794 = vmul.f32 %v762, %v778
        %v795 = vmul.f32 %v763, %v779
        %v796 = vmul.f32 %v764, %v780
        %v797 = vadd.f32 %v781, %v789
        %v798 = vrot.slane %v797, 4
        %v799 = vadd.f32 %v797, %v798
        %v800 = vrot.slane %v799, 2
        %v801 = vadd.f32 %v799, %v800
        %v802 = vrot.slane %v801, 1
        %v803 = vadd.f32 %v801, %v802
        %v804 = vadd.f32 %v782, %v790
        %v805 = vrot.slane %v804, 4
        %v806 = vadd.f32 %v804, %v805
        %v807 = vrot.slane %v806, 2
        %v808 = vadd.f32 %v806, %v807
        %v809 = vrot.slane %v808, 1
        %v810 = vadd.f32 %v808, %v809
        %v811 = vadd.f32 %v783, %v791
        %v812 = vrot.slane %v811, 4
        %v813 = vadd.f32 %v811, %v812
        %v814 = vrot.slane %v813, 2
        %v815 = vadd.f32 %v813, %v814
        %v816 = vrot.slane %v815, 1
        %v817 = vadd.f32 %v815, %v816
        %v818 = vadd.f32 %v784, %v792
        %v819 = vrot.slane %v818, 4
        %v820 = vadd.f32 %v818, %v819
        %v821 = vrot.slane %v820, 2
        %v822 = vadd.f32 %v820, %v821
        %v823 = vrot.slane %v822, 1
        %v824 = vadd.f32 %v822, %v823
        %v825 = vadd.f32 %v785, %v793
        %v826 = vrot.slane %v825, 4
        %v827 = vadd.f32 %v825, %v826
        %v828 = vrot.slane %v827, 2
        %v829 = vadd.f32 %v827, %v828
        %v830 = vrot.slane %v829, 1
        %v831 = vadd.f32 %v829, %v830
        %v832 = vadd.f32 %v786, %v794
        %v833 = vrot.slane %v832, 4
        %v834 = vadd.f32 %v832, %v833
        %v835 = vrot.slane %v834, 2
        %v836 = vadd.f32 %v834, %v835
        %v837 = vrot.slane %v836, 1
        %v838 = vadd.f32 %v836, %v837
        %v839 = vadd.f32 %v787, %v795
        %v840 = vrot.slane %v839, 4
        %v841 = vadd.f32 %v839, %v840
        %v842 = vrot.slane %v841, 2
        %v843 = vadd.f32 %v841, %v842
        %v844 = vrot.slane %v843, 1
        %v845 = vadd.f32 %v843, %v844
        %v846 = vadd.f32 %v788, %v796
        %v847 = vrot.slane %v846, 4
        %v848 = vadd.f32 %v846, %v847
        %v849 = vrot.slane %v848, 2
        %v850 = vadd.f32 %v848, %v849
        %v851 = vrot.slane %v850, 1
        %v852 = vadd.f32 %v850, %v851
        %v853 = vadd.f32 %v803, %v810
        %854 = vadd.xlane.f32.xlu0 %v853
        %v855 = vpop.xlane.xlu0 %854
        %v856 = vadd.f32 %v817, %v824
        %857 = vadd.xlane.f32.xlu0 %v856
        %v858 = vpop.xlane.xlu0 %857
        %v859 = vadd.f32 %v831, %v838
        %860 = vadd.xlane.f32.xlu0 %v859
        %v861 = vpop.xlane.xlu0 %860
        %v862 = vadd.f32 %v845, %v852
        %863 = vadd.xlane.f32.xlu0 %v862
        %v864 = vpop.xlane.xlu0 %863
        %vm865 = vcmask 7168
        %v866 = vsel %vm865, %v855, %v858
        %vm867 = vcmask 15360
        %v868 = vsel %vm867, %v866, %v861
        %vm869 = vcmask 23552
        %v870 = vsel %vm869, %v868, %v864
        %s871 = scalar_lea.vmem [#allocation5], 128
        %v872 = vld [vmem:[%s871] sm:$0xff]
        %v873 = vld [vmem:[%s871 + $0x8] sm:$0xff]
        %v874 = vld [vmem:[%s871 + $0x10] sm:$0xff]
        %v875 = vld [vmem:[%s871 + $0x18] sm:$0xff]
        %v876 = vld [vmem:[%s871 + $0x20] sm:$0xff]
        %v877 = vld [vmem:[%s871 + $0x28] sm:$0xff]
        %v878 = vld [vmem:[%s871 + $0x30] sm:$0xff]
        %v879 = vld [vmem:[%s871 + $0x38] sm:$0xff]
        %v880 = vld [vmem:[%s871 + $0x40] sm:$0xff]
        %v881 = vld [vmem:[%s871 + $0x48] sm:$0xff]
        %v882 = vld [vmem:[%s871 + $0x50] sm:$0xff]
        %v883 = vld [vmem:[%s871 + $0x58] sm:$0xff]
        %v884 = vld [vmem:[%s871 + $0x60] sm:$0xff]
        %v885 = vld [vmem:[%s871 + $0x68] sm:$0xff]
        %v886 = vld [vmem:[%s871 + $0x70] sm:$0xff]
        %v887 = vld [vmem:[%s871 + $0x78] sm:$0xff]
        %v888 = vmul.f32 %v749, %v872
        %v889 = vmul.f32 %v750, %v873
        %v890 = vmul.f32 %v751, %v874
        %v891 = vmul.f32 %v752, %v875
        %v892 = vmul.f32 %v753, %v876
        %v893 = vmul.f32 %v754, %v877
        %v894 = vmul.f32 %v755, %v878
        %v895 = vmul.f32 %v756, %v879
        %v896 = vmul.f32 %v757, %v880
        %v897 = vmul.f32 %v758, %v881
        %v898 = vmul.f32 %v759, %v882
        %v899 = vmul.f32 %v760, %v883
        %v900 = vmul.f32 %v761, %v884
        %v901 = vmul.f32 %v762, %v885
        %v902 = vmul.f32 %v763, %v886
        %v903 = vmul.f32 %v764, %v887
        %v904 = vadd.f32 %v888, %v896
        %v905 = vrot.slane %v904, 4
        %v906 = vadd.f32 %v904, %v905
        %v907 = vrot.slane %v906, 2
        %v908 = vadd.f32 %v906, %v907
        %v909 = vrot.slane %v908, 1
        %v910 = vadd.f32 %v908, %v909
        %v911 = vadd.f32 %v889, %v897
        %v912 = vrot.slane %v911, 4
        %v913 = vadd.f32 %v911, %v912
        %v914 = vrot.slane %v913, 2
        %v915 = vadd.f32 %v913, %v914
        %v916 = vrot.slane %v915, 1
        %v917 = vadd.f32 %v915, %v916
        %v918 = vadd.f32 %v890, %v898
        %v919 = vrot.slane %v918, 4
        %v920 = vadd.f32 %v918, %v919
        %v921 = vrot.slane %v920, 2
        %v922 = vadd.f32 %v920, %v921
        %v923 = vrot.slane %v922, 1
        %v924 = vadd.f32 %v922, %v923
        %v925 = vadd.f32 %v891, %v899
        %v926 = vrot.slane %v925, 4
        %v927 = vadd.f32 %v925, %v926
        %v928 = vrot.slane %v927, 2
        %v929 = vadd.f32 %v927, %v928
        %v930 = vrot.slane %v929, 1
        %v931 = vadd.f32 %v929, %v930
        %v932 = vadd.f32 %v892, %v900
        %v933 = vrot.slane %v932, 4
        %v934 = vadd.f32 %v932, %v933
        %v935 = vrot.slane %v934, 2
        %v936 = vadd.f32 %v934, %v935
        %v937 = vrot.slane %v936, 1
        %v938 = vadd.f32 %v936, %v937
        %v939 = vadd.f32 %v893, %v901
        %v940 = vrot.slane %v939, 4
        %v941 = vadd.f32 %v939, %v940
        %v942 = vrot.slane %v941, 2
        %v943 = vadd.f32 %v941, %v942
        %v944 = vrot.slane %v943, 1
        %v945 = vadd.f32 %v943, %v944
        %v946 = vadd.f32 %v894, %v902
        %v947 = vrot.slane %v946, 4
        %v948 = vadd.f32 %v946, %v947
        %v949 = vrot.slane %v948, 2
        %v950 = vadd.f32 %v948, %v949
        %v951 = vrot.slane %v950, 1
        %v952 = vadd.f32 %v950, %v951
        %v953 = vadd.f32 %v895, %v903
        %v954 = vrot.slane %v953, 4
        %v955 = vadd.f32 %v953, %v954
        %v956 = vrot.slane %v955, 2
        %v957 = vadd.f32 %v955, %v956
        %v958 = vrot.slane %v957, 1
        %v959 = vadd.f32 %v957, %v958
        %v960 = vadd.f32 %v910, %v917
        %961 = vadd.xlane.f32.xlu0 %v960
        %v962 = vpop.xlane.xlu0 %961
        %v963 = vadd.f32 %v924, %v931
        %964 = vadd.xlane.f32.xlu0 %v963
        %v965 = vpop.xlane.xlu0 %964
        %v966 = vadd.f32 %v938, %v945
        %967 = vadd.xlane.f32.xlu0 %v966
        %v968 = vpop.xlane.xlu0 %967
        %v969 = vadd.f32 %v952, %v959
        %970 = vadd.xlane.f32.xlu0 %v969
        %v971 = vpop.xlane.xlu0 %970
        %v972 = vsel %vm865, %v962, %v965
        %v973 = vsel %vm867, %v972, %v968
        %v974 = vsel %vm869, %v973, %v971
        %v976 = vrot.slane %v974, 7
        %vm978 = vcmask 1040384
        %v979 = vsel %vm978, %v870, %v976
        %v980 = vld [vmem:[%s4] sm:$0x3]
        %982 = vset.pattern.permute.xlu0 0
        %983 = vperm.xlu0 %982, %v980
        %v984 = vpop.permute.xlu0 %983
        %v986 = vadd.f32 %v979, %v984
        %vm987 = vcmask 25600
        %988 = vst.msk [vmem:[%s257] sm:$0x3] %vm987, %v986
        %s989 = sand.u32 %s141, 1
        %s990 = scalar_lea.sflag [#allocation4], %s989
        %s991 = sand.u32 %s141, 1
        %s992 = smul.addr %s991, 2
        %s993 = scalar_lea.vmem [#allocation7], %s992
        // Predicated region
        $region49: #{tpu_custom_call.1} parent=39 // pred_check
          %p994 = pneg %p151
        $region50: #{tpu_custom_call.1} parent=39 // pred_check_branch
          %996 = sbr.rel (%p994) target = $region52
        $region51: #{tpu_custom_call.1} parent=39 // pred_region
          %s998 = ssub.s32 32, 32
          %999 = vsyncadd %s990, %s998
          %s1000 = smul.addr %s23, 32
          %s1001 = scalar_lea.hbm %s5, %s1000
          %s1003 = sshll.u32 %s993, 4
          %s1004 = int_to_ptr.vmem [resolvable:$true] %s1003
          %1006 = dma.vmem_to_hbm [thread:$0]  %s1004, 32, %s1001, %s990
        $region52: #{tpu_custom_call.1} parent=39 // pred_fallthru
          _
      $region40: #{tpu_custom_call.1} parent=5 // pred_fallthru
        _
      %p1007 = scmp.le.s32.totalorder 2, %s18
      // Predicated region
      $region53: #{tpu_custom_call.1} parent=5 // pred_check
        %p1008 = pneg %p1007
      $region54: #{tpu_custom_call.1} parent=5 // pred_check_branch
        %1010 = sbr.rel (%p1008) target = $region56
      $region55: #{tpu_custom_call.1} parent=5 // pred_region
        %s1011 = ssub.s32 %s18, 2
        // Predicated region
        $region57: #{tpu_custom_call.1} parent=55 // pred_check
          %p1012 = pneg %p157
        $region58: #{tpu_custom_call.1} parent=55 // pred_check_branch
          %1014 = sbr.rel (%p1012) target = $region60
        $region59: #{tpu_custom_call.1} parent=55 // pred_region
          %s1015 = sand.u32 %s142, 1
          %s1016 = scalar_lea.sflag [#allocation4], %s1015
          %s1017 = sand.u32 %s142, 1
          %s1018 = smul.addr %s1017, 2
          %s1019 = scalar_lea.vmem [#allocation7], %s1018
          %1020 = dma.done %s1016, 32
        $region60: #{tpu_custom_call.1} parent=55 // pred_fallthru
          _
      $region56: #{tpu_custom_call.1} parent=5 // pred_fallthru
        _
    $region6: #{tpu_custom_call.1} parent=1 // loop_footer
      %s22 = sadd.s32 1, %s18
    $region7: #{tpu_custom_call.1} parent=1 // loop_footer_branch
      %17 = sbr.rel target = $region3
    $region8: #{tpu_custom_call.1} parent=1 // loop_exit
      _
    %1021 = vsyncpa [#allocation3], 1
    %s1022 = scalar_lea.sflag [#allocation3], 1
    %1023 = vsyncpa %s1022, 1
    %1024 = vsyncpa [#allocation6], 1
    %1025 = vsyncpa [#allocation4], 1
    %s1026 = scalar_lea.sflag [#allocation4], 1
    %1027 = vsyncpa %s1026, 1

</llo_original>
